<compile_context>
chip_gen: v5e
topology: v5e:2x2
jax: 0.10.0
libtpu: 0.0.40
codegen_flags: <defaults>
</compile_context>

<pallas_src>
import functools

import jax
import jax.numpy as jnp
from jax import lax
from jax.experimental import pallas as pl
from jax.experimental.pallas import tpu as pltpu


def _layernorm(x, gamma, beta, eps=1e-5):
    mu = jnp.mean(x, axis=-1, keepdims=True)
    xc = x - mu
    var = jnp.mean(xc * xc, axis=-1, keepdims=True)
    return xc * lax.rsqrt(var + eps) * gamma + beta


def ccanet_kernel(
    # inputs
    graph_ref, motif_ref,      # (tile_n, graph_dim), (tile_n, pattern_dim)
    wg_ref, wm_ref,            # (graph_dim, H), (pattern_dim, H)
    bias_ref,                  # (5, H): rows = bg, bm, ln_gamma, ln_beta, b1
    w1_ref,                    # (2H, H)
    whead_ref, bhead_ref,      # (H, 2), (1, 2): [wmean | wvar], [bmean | bvar]
    # outputs
    mv_ref,                    # (tile_n, 2): [mean | var]
    reg_ref,                   # (1, 1): cca regularizer (written at last step)
    # scratch (persist across the N-grid)
    acc_c1, acc_c2,            # (H, H) f32 accumulators for gcca^T gcca, mcca^T mcca
    acc_lin,                   # (1, 1) f32: -sum(g*m) - 2*lam*(sum(g*g)+sum(m*m))
    *, lam, hidden_dim, compute_dtype,
):
    i = pl.program_id(0)
    nsteps = pl.num_programs(0)

    @pl.when(i == 0)
    def _init():
        acc_c1[...] = jnp.zeros_like(acc_c1)
        acc_c2[...] = jnp.zeros_like(acc_c2)
        acc_lin[...] = jnp.zeros_like(acc_lin)

    # Unpack the packed small operands (value-level sublane slices, cheap).
    bias = bias_ref[...]
    bg, bm = bias[0:1], bias[1:2]
    ln_g, ln_b = bias[2:3], bias[3:4]
    b1 = bias[4:5]

    g = graph_ref[...]
    m = motif_ref[...]

    # Linear + shared LayerNorm branches.
    gh = jnp.dot(g, wg_ref[...], preferred_element_type=jnp.float32) + bg
    mh = jnp.dot(m, wm_ref[...], preferred_element_type=jnp.float32) + bm
    gcca = _layernorm(gh, ln_g, ln_b)
    mcca = _layernorm(mh, ln_g, ln_b)

    # Regularizer "linear" terms -- pure VPU/XLU, no H x H cross matmul, no
    # identity matrix:
    #   reg = -tr(C) + lam*(2H - 2 tr(C1) - 2 tr(C2) + ||C1||_F^2 + ||C2||_F^2)
    #   tr(C)  = sum(gcca*mcca),  tr(C1) = sum(gcca*gcca),  tr(C2) = sum(mcca*mcca)
    acc_lin[...] += (
        -jnp.sum(gcca * mcca, keepdims=True)
        - 2.0 * lam * (jnp.sum(gcca * gcca, keepdims=True)
                       + jnp.sum(mcca * mcca, keepdims=True))
    )

    # Covariance accumulators (contract over the row/tile axis).
    gc = gcca.astype(compute_dtype)
    mc = mcca.astype(compute_dtype)
    dn = (((0,), (0,)), ((), ()))
    acc_c1[...] += lax.dot_general(gc, gc, dn, preferred_element_type=jnp.float32)
    acc_c2[...] += lax.dot_general(mc, mc, dn, preferred_element_type=jnp.float32)

    # Prediction head.  pred_layer1 on concat([gcca, mcca]) == split-weight sum
    # of the single packed (2H, H) weight (avoids a lane-relayout concat);
    # mean/var fused into one (H, 2) matmul.
    h = hidden_dim
    w1 = w1_ref[...]
    y = (jnp.dot(gc, w1[:h].astype(compute_dtype), preferred_element_type=jnp.float32)
         + jnp.dot(mc, w1[h:].astype(compute_dtype), preferred_element_type=jnp.float32)
         + b1)
    y = jnp.maximum(y, 0.0)
    mv = jnp.dot(y.astype(compute_dtype), whead_ref[...].astype(compute_dtype),
                 preferred_element_type=jnp.float32) + bhead_ref[...]
    mv_ref[...] = jnp.maximum(mv, 0.0)

    @pl.when(i == nsteps - 1)
    def _finalize():
        c1 = acc_c1[...]
        c2 = acc_c2[...]
        quad = jnp.sum(c1 * c1) + jnp.sum(c2 * c2)
        reg_ref[...] = acc_lin[...] + lam * (2.0 * hidden_dim + quad)


def ccanet_forward(graph, motif, params, *, lam=0.1, tile_n=None,
                   compute_dtype=jnp.float32):
    """Run the CCANet forward.  `compute_dtype=jnp.bfloat16` enables the bf16
    MXU path for the covariance/head matmuls (recommended at production N/H on
    v6e/v7x); default f32 keeps the numerical check tight."""
    n, graph_dim = graph.shape
    pattern_dim = motif.shape[1]
    h = params["wg"].shape[1]

    if tile_n is None:
        tile_n = n
    assert n % tile_n == 0, "tile_n must divide N"
    assert tile_n == n or tile_n % 8 == 0, "tile_n must be a multiple of 8 (f32 sublane)"

    kernel = functools.partial(
        ccanet_kernel, lam=float(lam), hidden_dim=h, compute_dtype=compute_dtype)

    # TODO(synk): for very large N on v7x, split the row-parallel portion across
    # both TensorCores (per-core partial c1/c2 combined in a tiny second kernel)
    # instead of this single "arbitrary" reduction axis.
    mv, reg = pl.pallas_call(
        kernel,
        out_shape=(
            jax.ShapeDtypeStruct((n, 2), jnp.float32),   # [mean | var] slab
            jax.ShapeDtypeStruct((1, 1), jnp.float32),   # cca regularizer
        ),
        grid_spec=pltpu.PrefetchScalarGridSpec(
            num_scalar_prefetch=0,
            grid=(n // tile_n,),
            in_specs=[
                pl.BlockSpec((tile_n, graph_dim), lambda i: (i, 0)),    # graph rows
                pl.BlockSpec((tile_n, pattern_dim), lambda i: (i, 0)),  # motif rows
                pl.BlockSpec((graph_dim, h), lambda i: (0, 0)),         # wg (resident)
                pl.BlockSpec((pattern_dim, h), lambda i: (0, 0)),       # wm (resident)
                pl.BlockSpec((5, h), lambda i: (0, 0)),                 # packed biases/LN
                pl.BlockSpec((2 * h, h), lambda i: (0, 0)),             # w1 (resident)
                pl.BlockSpec((h, 2), lambda i: (0, 0)),                 # [wmean|wvar]
                pl.BlockSpec((1, 2), lambda i: (0, 0)),                 # [bmean|bvar]
            ],
            out_specs=(
                pl.BlockSpec((tile_n, 2), lambda i: (i, 0)),
                pl.BlockSpec((1, 1), lambda i: (0, 0)),
            ),
            scratch_shapes=[
                pltpu.VMEM((h, h), jnp.float32),   # acc_c1
                pltpu.VMEM((h, h), jnp.float32),   # acc_c2
                pltpu.VMEM((1, 1), jnp.float32),   # acc_lin
            ],
        ),
        compiler_params=pltpu.CompilerParams(
            dimension_semantics=("arbitrary",),    # reg reduces over the N-grid axis
        ),
    )(graph, motif, params["wg"], params["wm"], params["bias_pack"],
      params["w1"], params["whead"], params["bhead"])

    mean = mv[:, 0:1]
    var = mv[:, 1:2]
    return mean, var, reg[0, 0]


def ccanet_reference(graph, motif, params, *, lam=0.1):
    """Pure-JAX reference (mirrors the torch forward) for numerical validation."""
    bias = params["bias_pack"]
    bg, bm, ln_g, ln_b, b1 = (bias[i:i + 1] for i in range(5))

    def ln(x):
        mu = jnp.mean(x, -1, keepdims=True)
        v = jnp.mean((x - mu) ** 2, -1, keepdims=True)
        return (x - mu) / jnp.sqrt(v + 1e-5) * ln_g + ln_b

    gcca = ln(graph @ params["wg"] + bg)
    mcca = ln(motif @ params["wm"] + bm)
    c = gcca.T @ mcca
    c1 = gcca.T @ gcca
    c2 = mcca.T @ mcca
    iden = jnp.eye(c.shape[0], dtype=jnp.float32)
    reg = -jnp.trace(c) + lam * (jnp.sum((iden - c1) ** 2) + jnp.sum((iden - c2) ** 2))
    y = jnp.maximum(jnp.concatenate([gcca, mcca], axis=1) @ params["w1"] + b1, 0.0)
    mv = jnp.maximum(y @ params["whead"] + params["bhead"], 0.0)
    return mv[:, 0:1], mv[:, 1:2], reg


def init_params(key, pattern_dim, graph_dim, hidden_dim):
    """Deterministic synthetic init matching the torch module's shapes
    (xavier/kaiming-style uniform fans; biases zero, LN affine = identity).
    Parameters are pre-packed for the kernel (done once, not per call)."""
    ks = jax.random.split(key, 5)

    def xavier(k, fan_in, fan_out):
        bound = jnp.sqrt(6.0 / (fan_in + fan_out))
        return jax.random.uniform(k, (fan_in, fan_out), jnp.float32, -bound, bound)

    def kaiming(k, fan_in, fan_out):
        bound = jnp.sqrt(6.0 / fan_in)
        return jax.random.uniform(k, (fan_in, fan_out), jnp.float32, -bound, bound)

    h = hidden_dim
    bias_pack = jnp.concatenate([
        jnp.zeros((1, h), jnp.float32),   # graph_layer bias
        jnp.zeros((1, h), jnp.float32),   # motif_layer bias
        jnp.ones((1, h), jnp.float32),    # LayerNorm gamma
        jnp.zeros((1, h), jnp.float32),   # LayerNorm beta
        jnp.zeros((1, h), jnp.float32),   # pred_layer1 bias
    ], axis=0)
    return {
        "wg": xavier(ks[0], graph_dim, h),
        "wm": xavier(ks[1], pattern_dim, h),
        "bias_pack": bias_pack,
        "w1": xavier(ks[2], 2 * h, h),                                   # (2H, H)
        "whead": jnp.concatenate([kaiming(ks[3], h, 1),
                                  kaiming(ks[4], h, 1)], axis=1),        # (H, 2)
        "bhead": jnp.zeros((1, 2), jnp.float32),
    }


if __name__ == "__main__":
    # Small shapes consistent with the module's forward:
    #   graph: [N, graph_dim], motif: [N, pattern_dim]
    # NOTE: nn.Dropout is declared in the torch module but never applied in
    # forward(), so there is nothing to translate for it.
    N, pattern_dim, graph_dim, hidden_dim = 8, 16, 32, 32

    key = jax.random.PRNGKey(0)
    k_g, k_m, k_p = jax.random.split(key, 3)
    graph = jax.random.normal(k_g, (N, graph_dim), jnp.float32)
    motif = jax.random.normal(k_m, (N, pattern_dim), jnp.float32)
    params = init_params(k_p, pattern_dim, graph_dim, hidden_dim)

    # Single-tile path (grid of 1).
    mean, var, reg = ccanet_forward(graph, motif, params, lam=0.1)
    jax.block_until_ready((mean, var, reg))
    mean_r, var_r, reg_r = ccanet_reference(graph, motif, params, lam=0.1)
    assert jnp.allclose(mean, mean_r, atol=1e-4, rtol=1e-4)
    assert jnp.allclose(var, var_r, atol=1e-4, rtol=1e-4)
    assert jnp.allclose(reg, reg_r, atol=1e-3, rtol=1e-3)

    # Gridded accumulator path (N tiled over 2 steps) to validate the scale plan.
    N2 = 16
    k_g2, k_m2 = jax.random.split(jax.random.PRNGKey(1), 2)
    graph2 = jax.random.normal(k_g2, (N2, graph_dim), jnp.float32)
    motif2 = jax.random.normal(k_m2, (N2, pattern_dim), jnp.float32)
    mean2, var2, reg2 = ccanet_forward(graph2, motif2, params, lam=0.1, tile_n=8)
    jax.block_until_ready((mean2, var2, reg2))
    mean2_r, var2_r, reg2_r = ccanet_reference(graph2, motif2, params, lam=0.1)
    assert jnp.allclose(mean2, mean2_r, atol=1e-4, rtol=1e-4)
    assert jnp.allclose(var2, var2_r, atol=1e-4, rtol=1e-4)
    assert jnp.allclose(reg2, reg2_r, atol=1e-3, rtol=1e-3)

    print("KERNEL_OK")
</pallas_src>

<mosaic_0001>
module attributes {stable_mosaic.version = 11 : i64} {
  func.func @ccanet_kernel(%arg0: i32, %arg1: memref<8x32xf32, #tpu.memory_space<vmem>>, %arg2: memref<8x16xf32, #tpu.memory_space<vmem>>, %arg3: memref<32x32xf32, #tpu.memory_space<vmem>>, %arg4: memref<16x32xf32, #tpu.memory_space<vmem>>, %arg5: memref<5x32xf32, #tpu.memory_space<vmem>>, %arg6: memref<64x32xf32, #tpu.memory_space<vmem>>, %arg7: memref<32x2xf32, #tpu.memory_space<vmem>>, %arg8: memref<1x2xf32, #tpu.memory_space<vmem>>, %arg9: memref<8x2xf32, #tpu.memory_space<vmem>>, %arg10: memref<1x1xf32, #tpu.memory_space<vmem>>, %arg11: memref<32x32xf32, #tpu.memory_space<vmem>>, %arg12: memref<32x32xf32, #tpu.memory_space<vmem>>, %arg13: memref<1x1xf32, #tpu.memory_space<vmem>>) attributes {dimension_semantics = [#tpu.dimension_semantics<arbitrary>], iteration_bounds = array<i64: 1>, scalar_prefetch = 0 : i64, scratch_operands = 3 : i64, tpu.core_type = #tpu.core_type<tc>, window_params = [{transform_indices = @transform_0, window_bounds = array<i64: 8, 32>}, {transform_indices = @transform_1, window_bounds = array<i64: 8, 16>}, {pipeline_mode = #tpu.pipeline_mode<synchronous>, transform_indices = @transform_2, window_bounds = array<i64: 32, 32>}, {pipeline_mode = #tpu.pipeline_mode<synchronous>, transform_indices = @transform_3, window_bounds = array<i64: 16, 32>}, {pipeline_mode = #tpu.pipeline_mode<synchronous>, transform_indices = @transform_4, window_bounds = array<i64: 5, 32>}, {pipeline_mode = #tpu.pipeline_mode<synchronous>, transform_indices = @transform_5, window_bounds = array<i64: 64, 32>}, {pipeline_mode = #tpu.pipeline_mode<synchronous>, transform_indices = @transform_6, window_bounds = array<i64: 32, 2>}, {pipeline_mode = #tpu.pipeline_mode<synchronous>, transform_indices = @transform_7, window_bounds = array<i64: 1, 2>}, {transform_indices = @transform_8, window_bounds = array<i64: 8, 2>}, {pipeline_mode = #tpu.pipeline_mode<synchronous>, transform_indices = @transform_9, window_bounds = array<i64: 1, 1>}]} {
    %c0_i32 = arith.constant 0 : i32
    %0 = arith.cmpi eq, %arg0, %c0_i32 : i32
    %1 = arith.extui %0 : i1 to i32
    %c0_i32_0 = arith.constant 0 : i32
    %2 = arith.cmpi ne, %1, %c0_i32_0 : i32
    scf.if %2 {
      %cst_55 = arith.constant 0.000000e+00 : f32
      %115 = vector.broadcast %cst_55 : f32 to vector<32x32xf32>
      %c0_56 = arith.constant 0 : index
      %c0_57 = arith.constant 0 : index
      %116 = vector.load %arg11[%c0_56, %c0_57] : memref<32x32xf32, #tpu.memory_space<vmem>>, vector<32x32xf32>
      tpu.vector_store %arg11[%c0_56, %c0_57], %115 {strides = array<i32>} : memref<32x32xf32, #tpu.memory_space<vmem>>, vector<32x32xf32>,
      %cst_58 = arith.constant 0.000000e+00 : f32
      %117 = vector.broadcast %cst_58 : f32 to vector<32x32xf32>
      %c0_59 = arith.constant 0 : index
      %c0_60 = arith.constant 0 : index
      %118 = vector.load %arg12[%c0_59, %c0_60] : memref<32x32xf32, #tpu.memory_space<vmem>>, vector<32x32xf32>
      tpu.vector_store %arg12[%c0_59, %c0_60], %117 {strides = array<i32>} : memref<32x32xf32, #tpu.memory_space<vmem>>, vector<32x32xf32>,
      %cst_61 = arith.constant 0.000000e+00 : f32
      %119 = vector.broadcast %cst_61 : f32 to vector<1x1xf32>
      %c0_62 = arith.constant 0 : index
      %c0_63 = arith.constant 0 : index
      %120 = vector.load %arg13[%c0_62, %c0_63] : memref<1x1xf32, #tpu.memory_space<vmem>>, vector<1x1xf32>
      tpu.vector_store %arg13[%c0_62, %c0_63], %119 {strides = array<i32>} : memref<1x1xf32, #tpu.memory_space<vmem>>, vector<1x1xf32>,
    } else {
    }
    %c0 = arith.constant 0 : index
    %c0_1 = arith.constant 0 : index
    %3 = vector.load %arg5[%c0, %c0_1] : memref<5x32xf32, #tpu.memory_space<vmem>>, vector<5x32xf32>
    %4 = vector.extract_strided_slice %3 {offsets = [0, 0], sizes = [1, 32], strides = [1, 1]} : vector<5x32xf32> to vector<1x32xf32>
    %5 = vector.extract_strided_slice %3 {offsets = [1, 0], sizes = [1, 32], strides = [1, 1]} : vector<5x32xf32> to vector<1x32xf32>
    %6 = vector.extract_strided_slice %3 {offsets = [2, 0], sizes = [1, 32], strides = [1, 1]} : vector<5x32xf32> to vector<1x32xf32>
    %7 = vector.extract_strided_slice %3 {offsets = [3, 0], sizes = [1, 32], strides = [1, 1]} : vector<5x32xf32> to vector<1x32xf32>
    %8 = vector.extract_strided_slice %3 {offsets = [4, 0], sizes = [1, 32], strides = [1, 1]} : vector<5x32xf32> to vector<1x32xf32>
    %c0_2 = arith.constant 0 : index
    %c0_3 = arith.constant 0 : index
    %9 = vector.load %arg1[%c0_2, %c0_3] : memref<8x32xf32, #tpu.memory_space<vmem>>, vector<8x32xf32>
    %c0_4 = arith.constant 0 : index
    %c0_5 = arith.constant 0 : index
    %10 = vector.load %arg2[%c0_4, %c0_5] : memref<8x16xf32, #tpu.memory_space<vmem>>, vector<8x16xf32>
    %c0_6 = arith.constant 0 : index
    %c0_7 = arith.constant 0 : index
    %11 = vector.load %arg3[%c0_6, %c0_7] : memref<32x32xf32, #tpu.memory_space<vmem>>, vector<32x32xf32>
    %cst = arith.constant dense<0.000000e+00> : vector<8x32xf32>
    %12 = tpu.matmul %9, %11, %cst {dimension_numbers = #tpu.dot_dimension_numbers<[1], [0], [0], [1], [0, 0, 1, 1], [], []>} : vector<8x32xf32>, vector<32x32xf32>, vector<8x32xf32> -> vector<8x32xf32>
    %13 = vector.broadcast %4 : vector<1x32xf32> to vector<8x32xf32>
    %14 = arith.addf %12, %13 : vector<8x32xf32>
    %c0_8 = arith.constant 0 : index
    %c0_9 = arith.constant 0 : index
    %15 = vector.load %arg4[%c0_8, %c0_9] : memref<16x32xf32, #tpu.memory_space<vmem>>, vector<16x32xf32>
    %cst_10 = arith.constant dense<0.000000e+00> : vector<8x32xf32>
    %16 = tpu.matmul %10, %15, %cst_10 {dimension_numbers = #tpu.dot_dimension_numbers<[1], [0], [0], [1], [0, 0, 1, 1], [], []>} : vector<8x16xf32>, vector<16x32xf32>, vector<8x32xf32> -> vector<8x32xf32>
    %17 = vector.broadcast %5 : vector<1x32xf32> to vector<8x32xf32>
    %18 = arith.addf %16, %17 : vector<8x32xf32>
    %cst_11 = arith.constant dense<0.000000e+00> : vector<8xf32>
    %19 = vector.multi_reduction <add>, %14, %cst_11 [1] : vector<8x32xf32> to vector<8xf32>
    %20 = vector.shape_cast %19 : vector<8xf32> to vector<8x1xf32>
    %cst_12 = arith.constant 3.200000e+01 : f32
    %21 = vector.broadcast %cst_12 : f32 to vector<8x1xf32>
    %22 = arith.divf %20, %21 : vector<8x1xf32>
    %23 = vector.broadcast %22 : vector<8x1xf32> to vector<8x32xf32>
    %24 = arith.subf %14, %23 : vector<8x32xf32>
    %25 = arith.mulf %24, %24 : vector<8x32xf32>
    %cst_13 = arith.constant dense<0.000000e+00> : vector<8xf32>
    %26 = vector.multi_reduction <add>, %25, %cst_13 [1] : vector<8x32xf32> to vector<8xf32>
    %27 = vector.shape_cast %26 : vector<8xf32> to vector<8x1xf32>
    %cst_14 = arith.constant 3.200000e+01 : f32
    %28 = vector.broadcast %cst_14 : f32 to vector<8x1xf32>
    %29 = arith.divf %27, %28 : vector<8x1xf32>
    %cst_15 = arith.constant 9.99999974E-6 : f32
    %30 = vector.broadcast %cst_15 : f32 to vector<8x1xf32>
    %31 = arith.addf %29, %30 : vector<8x1xf32>
    %32 = math.rsqrt %31 : vector<8x1xf32>
    %33 = vector.broadcast %32 : vector<8x1xf32> to vector<8x32xf32>
    %34 = arith.mulf %24, %33 : vector<8x32xf32>
    %35 = vector.broadcast %6 : vector<1x32xf32> to vector<8x32xf32>
    %36 = arith.mulf %34, %35 : vector<8x32xf32>
    %37 = vector.broadcast %7 : vector<1x32xf32> to vector<8x32xf32>
    %38 = arith.addf %36, %37 : vector<8x32xf32>
    %cst_16 = arith.constant dense<0.000000e+00> : vector<8xf32>
    %39 = vector.multi_reduction <add>, %18, %cst_16 [1] : vector<8x32xf32> to vector<8xf32>
    %40 = vector.shape_cast %39 : vector<8xf32> to vector<8x1xf32>
    %cst_17 = arith.constant 3.200000e+01 : f32
    %41 = vector.broadcast %cst_17 : f32 to vector<8x1xf32>
    %42 = arith.divf %40, %41 : vector<8x1xf32>
    %43 = vector.broadcast %42 : vector<8x1xf32> to vector<8x32xf32>
    %44 = arith.subf %18, %43 : vector<8x32xf32>
    %45 = arith.mulf %44, %44 : vector<8x32xf32>
    %cst_18 = arith.constant dense<0.000000e+00> : vector<8xf32>
    %46 = vector.multi_reduction <add>, %45, %cst_18 [1] : vector<8x32xf32> to vector<8xf32>
    %47 = vector.shape_cast %46 : vector<8xf32> to vector<8x1xf32>
    %cst_19 = arith.constant 3.200000e+01 : f32
    %48 = vector.broadcast %cst_19 : f32 to vector<8x1xf32>
    %49 = arith.divf %47, %48 : vector<8x1xf32>
    %cst_20 = arith.constant 9.99999974E-6 : f32
    %50 = vector.broadcast %cst_20 : f32 to vector<8x1xf32>
    %51 = arith.addf %49, %50 : vector<8x1xf32>
    %52 = math.rsqrt %51 : vector<8x1xf32>
    %53 = vector.broadcast %52 : vector<8x1xf32> to vector<8x32xf32>
    %54 = arith.mulf %44, %53 : vector<8x32xf32>
    %55 = vector.broadcast %6 : vector<1x32xf32> to vector<8x32xf32>
    %56 = arith.mulf %54, %55 : vector<8x32xf32>
    %57 = vector.broadcast %7 : vector<1x32xf32> to vector<8x32xf32>
    %58 = arith.addf %56, %57 : vector<8x32xf32>
    %c0_21 = arith.constant 0 : index
    %c0_22 = arith.constant 0 : index
    %59 = vector.load %arg13[%c0_21, %c0_22] : memref<1x1xf32, #tpu.memory_space<vmem>>, vector<1x1xf32>
    %60 = arith.mulf %38, %58 : vector<8x32xf32>
    %61 = vector.shape_cast %60 : vector<8x32xf32> to vector<1x8x32xf32>
    %cst_23 = arith.constant dense<0.000000e+00> : vector<1xf32>
    %62 = vector.multi_reduction <add>, %61, %cst_23 [1, 2] : vector<1x8x32xf32> to vector<1xf32>
    %63 = vector.shape_cast %62 : vector<1xf32> to vector<1x1x1xf32>
    %64 = vector.extract %63[0, 0, 0] : f32 from vector<1x1x1xf32>
    %65 = vector.broadcast %64 : f32 to vector<1x1xf32>
    %cst_24 = arith.constant 0.000000e+00 : f32
    %66 = vector.broadcast %cst_24 : f32 to vector<1x1xf32>
    %67 = arith.subf %66, %65 : vector<1x1xf32>
    %68 = arith.mulf %38, %38 : vector<8x32xf32>
    %69 = vector.shape_cast %68 : vector<8x32xf32> to vector<1x8x32xf32>
    %cst_25 = arith.constant dense<0.000000e+00> : vector<1xf32>
    %70 = vector.multi_reduction <add>, %69, %cst_25 [1, 2] : vector<1x8x32xf32> to vector<1xf32>
    %71 = vector.shape_cast %70 : vector<1xf32> to vector<1x1x1xf32>
    %72 = vector.extract %71[0, 0, 0] : f32 from vector<1x1x1xf32>
    %73 = vector.broadcast %72 : f32 to vector<1x1xf32>
    %74 = arith.mulf %58, %58 : vector<8x32xf32>
    %75 = vector.shape_cast %74 : vector<8x32xf32> to vector<1x8x32xf32>
    %cst_26 = arith.constant dense<0.000000e+00> : vector<1xf32>
    %76 = vector.multi_reduction <add>, %75, %cst_26 [1, 2] : vector<1x8x32xf32> to vector<1xf32>
    %77 = vector.shape_cast %76 : vector<1xf32> to vector<1x1x1xf32>
    %78 = vector.extract %77[0, 0, 0] : f32 from vector<1x1x1xf32>
    %79 = vector.broadcast %78 : f32 to vector<1x1xf32>
    %80 = arith.addf %73, %79 : vector<1x1xf32>
    %cst_27 = arith.constant 2.000000e-01 : f32
    %81 = vector.broadcast %cst_27 : f32 to vector<1x1xf32>
    %82 = arith.mulf %81, %80 : vector<1x1xf32>
    %83 = arith.subf %67, %82 : vector<1x1xf32>
    %84 = arith.addf %59, %83 : vector<1x1xf32>
    %c0_28 = arith.constant 0 : index
    %c0_29 = arith.constant 0 : index
    %85 = vector.load %arg13[%c0_28, %c0_29] : memref<1x1xf32, #tpu.memory_space<vmem>>, vector<1x1xf32>
    tpu.vector_store %arg13[%c0_28, %c0_29], %84 {strides = array<i32>} : memref<1x1xf32, #tpu.memory_space<vmem>>, vector<1x1xf32>,
    %c0_30 = arith.constant 0 : index
    %c0_31 = arith.constant 0 : index
    %86 = vector.load %arg11[%c0_30, %c0_31] : memref<32x32xf32, #tpu.memory_space<vmem>>, vector<32x32xf32>
    %cst_32 = arith.constant dense<0.000000e+00> : vector<32x32xf32>
    %87 = tpu.matmul %38, %38, %cst_32 {dimension_numbers = #tpu.dot_dimension_numbers<[0], [0], [1], [1], [0, 1, 1, 1], [], []>} : vector<8x32xf32>, vector<8x32xf32>, vector<32x32xf32> -> vector<32x32xf32>
    %88 = arith.addf %86, %87 : vector<32x32xf32>
    %c0_33 = arith.constant 0 : index
    %c0_34 = arith.constant 0 : index
    %89 = vector.load %arg11[%c0_33, %c0_34] : memref<32x32xf32, #tpu.memory_space<vmem>>, vector<32x32xf32>
    tpu.vector_store %arg11[%c0_33, %c0_34], %88 {strides = array<i32>} : memref<32x32xf32, #tpu.memory_space<vmem>>, vector<32x32xf32>,
    %c0_35 = arith.constant 0 : index
    %c0_36 = arith.constant 0 : index
    %90 = vector.load %arg12[%c0_35, %c0_36] : memref<32x32xf32, #tpu.memory_space<vmem>>, vector<32x32xf32>
    %cst_37 = arith.constant dense<0.000000e+00> : vector<32x32xf32>
    %91 = tpu.matmul %58, %58, %cst_37 {dimension_numbers = #tpu.dot_dimension_numbers<[0], [0], [1], [1], [0, 1, 1, 1], [], []>} : vector<8x32xf32>, vector<8x32xf32>, vector<32x32xf32> -> vector<32x32xf32>
    %92 = arith.addf %90, %91 : vector<32x32xf32>
    %c0_38 = arith.constant 0 : index
    %c0_39 = arith.constant 0 : index
    %93 = vector.load %arg12[%c0_38, %c0_39] : memref<32x32xf32, #tpu.memory_space<vmem>>, vector<32x32xf32>
    tpu.vector_store %arg12[%c0_38, %c0_39], %92 {strides = array<i32>} : memref<32x32xf32, #tpu.memory_space<vmem>>, vector<32x32xf32>,
    %c0_40 = arith.constant 0 : index
    %c0_41 = arith.constant 0 : index
    %94 = vector.load %arg6[%c0_40, %c0_41] : memref<64x32xf32, #tpu.memory_space<vmem>>, vector<64x32xf32>
    %95 = vector.extract_strided_slice %94 {offsets = [0, 0], sizes = [32, 32], strides = [1, 1]} : vector<64x32xf32> to vector<32x32xf32>
    %cst_42 = arith.constant dense<0.000000e+00> : vector<8x32xf32>
    %96 = tpu.matmul %38, %95, %cst_42 {dimension_numbers = #tpu.dot_dimension_numbers<[1], [0], [0], [1], [0, 0, 1, 1], [], []>} : vector<8x32xf32>, vector<32x32xf32>, vector<8x32xf32> -> vector<8x32xf32>
    %97 = vector.extract_strided_slice %94 {offsets = [32, 0], sizes = [32, 32], strides = [1, 1]} : vector<64x32xf32> to vector<32x32xf32>
    %cst_43 = arith.constant dense<0.000000e+00> : vector<8x32xf32>
    %98 = tpu.matmul %58, %97, %cst_43 {dimension_numbers = #tpu.dot_dimension_numbers<[1], [0], [0], [1], [0, 0, 1, 1], [], []>} : vector<8x32xf32>, vector<32x32xf32>, vector<8x32xf32> -> vector<8x32xf32>
    %99 = arith.addf %96, %98 : vector<8x32xf32>
    %100 = vector.broadcast %8 : vector<1x32xf32> to vector<8x32xf32>
    %101 = arith.addf %99, %100 : vector<8x32xf32>
    %cst_44 = arith.constant 0.000000e+00 : f32
    %102 = vector.broadcast %cst_44 : f32 to vector<8x32xf32>
    %103 = arith.maximumf %101, %102 : vector<8x32xf32>
    %c0_45 = arith.constant 0 : index
    %c0_46 = arith.constant 0 : index
    %104 = vector.load %arg7[%c0_45, %c0_46] : memref<32x2xf32, #tpu.memory_space<vmem>>, vector<32x2xf32>
    %cst_47 = arith.constant dense<0.000000e+00> : vector<8x2xf32>
    %105 = tpu.matmul %103, %104, %cst_47 {dimension_numbers = #tpu.dot_dimension_numbers<[1], [0], [0], [1], [0, 0, 1, 1], [], []>} : vector<8x32xf32>, vector<32x2xf32>, vector<8x2xf32> -> vector<8x2xf32>
    %c0_48 = arith.constant 0 : index
    %c0_49 = arith.constant 0 : index
    %106 = vector.load %arg8[%c0_48, %c0_49] : memref<1x2xf32, #tpu.memory_space<vmem>>, vector<1x2xf32>
    %107 = vector.broadcast %106 : vector<1x2xf32> to vector<8x2xf32>
    %108 = arith.addf %105, %107 : vector<8x2xf32>
    %cst_50 = arith.constant 0.000000e+00 : f32
    %109 = vector.broadcast %cst_50 : f32 to vector<8x2xf32>
    %110 = arith.maximumf %108, %109 : vector<8x2xf32>
    %c0_51 = arith.constant 0 : index
    %c0_52 = arith.constant 0 : index
    %111 = vector.load %arg9[%c0_51, %c0_52] : memref<8x2xf32, #tpu.memory_space<vmem>>, vector<8x2xf32>
    tpu.vector_store %arg9[%c0_51, %c0_52], %110 {strides = array<i32>} : memref<8x2xf32, #tpu.memory_space<vmem>>, vector<8x2xf32>,
    %c0_i32_53 = arith.constant 0 : i32
    %112 = arith.cmpi eq, %arg0, %c0_i32_53 : i32
    %113 = arith.extui %112 : i1 to i32
    %c0_i32_54 = arith.constant 0 : i32
    %114 = arith.cmpi ne, %113, %c0_i32_54 : i32
    scf.if %114 {
      %c0_55 = arith.constant 0 : index
      %c0_56 = arith.constant 0 : index
      %115 = vector.load %arg11[%c0_55, %c0_56] : memref<32x32xf32, #tpu.memory_space<vmem>>, vector<32x32xf32>
      %c0_57 = arith.constant 0 : index
      %c0_58 = arith.constant 0 : index
      %116 = vector.load %arg12[%c0_57, %c0_58] : memref<32x32xf32, #tpu.memory_space<vmem>>, vector<32x32xf32>
      %117 = arith.mulf %115, %115 : vector<32x32xf32>
      %118 = vector.shape_cast %117 : vector<32x32xf32> to vector<1x32x32xf32>
      %cst_59 = arith.constant dense<0.000000e+00> : vector<1xf32>
      %119 = vector.multi_reduction <add>, %118, %cst_59 [1, 2] : vector<1x32x32xf32> to vector<1xf32>
      %120 = vector.shape_cast %119 : vector<1xf32> to vector<1x1x1xf32>
      %121 = vector.extract %120[0, 0, 0] : f32 from vector<1x1x1xf32>
      %122 = arith.mulf %116, %116 : vector<32x32xf32>
      %123 = vector.shape_cast %122 : vector<32x32xf32> to vector<1x32x32xf32>
      %cst_60 = arith.constant dense<0.000000e+00> : vector<1xf32>
      %124 = vector.multi_reduction <add>, %123, %cst_60 [1, 2] : vector<1x32x32xf32> to vector<1xf32>
      %125 = vector.shape_cast %124 : vector<1xf32> to vector<1x1x1xf32>
      %126 = vector.extract %125[0, 0, 0] : f32 from vector<1x1x1xf32>
      %127 = arith.addf %121, %126 : f32
      %c0_61 = arith.constant 0 : index
      %c0_62 = arith.constant 0 : index
      %128 = vector.load %arg13[%c0_61, %c0_62] : memref<1x1xf32, #tpu.memory_space<vmem>>, vector<1x1xf32>
      %cst_63 = arith.constant 6.400000e+01 : f32
      %129 = arith.addf %cst_63, %127 : f32
      %cst_64 = arith.constant 1.000000e-01 : f32
      %130 = arith.mulf %cst_64, %129 : f32
      %131 = vector.broadcast %130 : f32 to vector<1x1xf32>
      %132 = arith.addf %128, %131 : vector<1x1xf32>
      %c0_65 = arith.constant 0 : index
      %c0_66 = arith.constant 0 : index
      %133 = vector.load %arg10[%c0_65, %c0_66] : memref<1x1xf32, #tpu.memory_space<vmem>>, vector<1x1xf32>
      tpu.vector_store %arg10[%c0_65, %c0_66], %132 {strides = array<i32>} : memref<1x1xf32, #tpu.memory_space<vmem>>, vector<1x1xf32>,
    } else {
    }
    return
  }
  func.func @transform_0(%arg0: i32) -> (i32, i32) {
    %c0_i32 = arith.constant 0 : i32
    %c0_i32_0 = arith.constant 0 : i32
    return %arg0, %c0_i32 : i32, i32
  }
  func.func @transform_1(%arg0: i32) -> (i32, i32) {
    %c0_i32 = arith.constant 0 : i32
    %c0_i32_0 = arith.constant 0 : i32
    return %arg0, %c0_i32 : i32, i32
  }
  func.func @transform_2(%arg0: i32) -> (i32, i32) {
    %c0_i32 = arith.constant 0 : i32
    %c0_i32_0 = arith.constant 0 : i32
    %c0_i32_1 = arith.constant 0 : i32
    return %c0_i32, %c0_i32_0 : i32, i32
  }
  func.func @transform_3(%arg0: i32) -> (i32, i32) {
    %c0_i32 = arith.constant 0 : i32
    %c0_i32_0 = arith.constant 0 : i32
    %c0_i32_1 = arith.constant 0 : i32
    return %c0_i32, %c0_i32_0 : i32, i32
  }
  func.func @transform_4(%arg0: i32) -> (i32, i32) {
    %c0_i32 = arith.constant 0 : i32
    %c0_i32_0 = arith.constant 0 : i32
    %c0_i32_1 = arith.constant 0 : i32
    return %c0_i32, %c0_i32_0 : i32, i32
  }
  func.func @transform_5(%arg0: i32) -> (i32, i32) {
    %c0_i32 = arith.constant 0 : i32
    %c0_i32_0 = arith.constant 0 : i32
    %c0_i32_1 = arith.constant 0 : i32
    return %c0_i32, %c0_i32_0 : i32, i32
  }
  func.func @transform_6(%arg0: i32) -> (i32, i32) {
    %c0_i32 = arith.constant 0 : i32
    %c0_i32_0 = arith.constant 0 : i32
    %c0_i32_1 = arith.constant 0 : i32
    return %c0_i32, %c0_i32_0 : i32, i32
  }
  func.func @transform_7(%arg0: i32) -> (i32, i32) {
    %c0_i32 = arith.constant 0 : i32
    %c0_i32_0 = arith.constant 0 : i32
    %c0_i32_1 = arith.constant 0 : i32
    return %c0_i32, %c0_i32_0 : i32, i32
  }
  func.func @transform_8(%arg0: i32) -> (i32, i32) {
    %c0_i32 = arith.constant 0 : i32
    %c0_i32_0 = arith.constant 0 : i32
    return %arg0, %c0_i32 : i32, i32
  }
  func.func @transform_9(%arg0: i32) -> (i32, i32) {
    %c0_i32 = arith.constant 0 : i32
    %c0_i32_0 = arith.constant 0 : i32
    %c0_i32_1 = arith.constant 0 : i32
    return %c0_i32, %c0_i32_0 : i32, i32
  }
}

</mosaic_0001>

<llo_original>
// kernel: tpu_custom_call.1
$region0: #{tpu_custom_call.1}
  #allocation0 [shape = 'u32[]', space=smem, size = 0x4, offset = 0x4, fixed_abs, tag = 'smem constant byte address 0x4 - core index']
  #allocation1 [shape = 'u32[72,128]{1,0:T(1,128)}', space=vmem, size = 0x9000, scoped, tag = 'internal scratch']
  #allocation2 [shape = 'f32[32,32]{1,0:T(8,128)}', space=vmem, size = 0x4000, scoped, tag = 'scratch operand']
  #allocation3 [shape = 'f32[32,32]{1,0:T(8,128)}', space=vmem, size = 0x4000, scoped, tag = 'scratch operand']
  #allocation4 [shape = 'f32[1,1]{1,0:T(1,128)}', space=vmem, size = 0x200, scoped, tag = 'scratch operand']
  %s0 = inlined_call_operand.vmem [shape: f32[8,32], index: 0, kind: input, shape index: {}]
  %s1 = inlined_call_operand.vmem [shape: f32[8,16], index: 1, kind: input, shape index: {}]
  %s2 = inlined_call_operand.vmem [shape: f32[32,32], index: 2, kind: input, shape index: {}]
  %s3 = inlined_call_operand.vmem [shape: f32[16,32], index: 3, kind: input, shape index: {}]
  %s4 = inlined_call_operand.vmem [shape: f32[5,32], index: 4, kind: input, shape index: {}]
  %s5 = inlined_call_operand.vmem [shape: f32[64,32], index: 5, kind: input, shape index: {}]
  %s6 = inlined_call_operand.vmem [shape: f32[32,2], index: 6, kind: input, shape index: {}]
  %s7 = inlined_call_operand.vmem [shape: f32[1,2], index: 7, kind: input, shape index: {}]
  %s8 = inlined_call_operand.vmem [shape: f32[8,2], index: 8, kind: output, shape index: {0}]
  %s9 = inlined_call_operand.hbm [shape: f32[1,1], index: 9, kind: output, shape index: {1}]
  %10 = xla_tuple %s8, %s9
  %s11 = sld [smem:[#allocation0]]
  $region58: #{tpu_custom_call.1} parent=0
    _
  %s13 = ssub.s32 1, %s11
  %s14 = scalar_select 0, %s13, %s11
  $region1: #{tpu_custom_call.1} parent=0
    #allocation5 [shape = 'u8[512]{0}', space=vmem, size = 0x400, scoped, tag = 'output window, operand 1, single buffered']
    #allocation6 [shape = 's32[1]{0}', space=sflag, size = 0x4, scoped, tag = 'scoped memory for tpu_custom_call.1']
    %15 = vsyncpa [#allocation6], 0
    // Predicated region
    $region2: #{tpu_custom_call.1} parent=1 // pred_check
      _
    $region3: #{tpu_custom_call.1} parent=1 // pred_check_branch
      %17 = sbr.rel (0) target = $region5
    $region4: #{tpu_custom_call.1} parent=1 // pred_region
      _
    $region5: #{tpu_custom_call.1} parent=1 // pred_fallthru
      _
    // Predicated region
    $region6: #{tpu_custom_call.1} parent=1 // pred_check
      _
    $region7: #{tpu_custom_call.1} parent=1 // pred_check_branch
      %19 = sbr.rel (0) target = $region9
    $region8: #{tpu_custom_call.1} parent=1 // pred_region
      _
    $region9: #{tpu_custom_call.1} parent=1 // pred_fallthru
      _
    // Predicated region
    $region10: #{tpu_custom_call.1} parent=1 // pred_check
      _
    $region11: #{tpu_custom_call.1} parent=1 // pred_check_branch
      %21 = sbr.rel (0) target = $region13
    $region12: #{tpu_custom_call.1} parent=1 // pred_region
      _
    $region13: #{tpu_custom_call.1} parent=1 // pred_fallthru
      _
    // Predicated region
    $region14: #{tpu_custom_call.1} parent=1 // pred_check
      _
    $region15: #{tpu_custom_call.1} parent=1 // pred_check_branch
      %23 = sbr.rel (0) target = $region17
    $region16: #{tpu_custom_call.1} parent=1 // pred_region
      _
    $region17: #{tpu_custom_call.1} parent=1 // pred_fallthru
      _
    // Predicated region
    $region18: #{tpu_custom_call.1} parent=1 // pred_check
      _
    $region19: #{tpu_custom_call.1} parent=1 // pred_check_branch
      %25 = sbr.rel (0) target = $region21
    $region20: #{tpu_custom_call.1} parent=1 // pred_region
      _
    $region21: #{tpu_custom_call.1} parent=1 // pred_fallthru
      _
    // Predicated region
    $region22: #{tpu_custom_call.1} parent=1 // pred_check
      _
    $region23: #{tpu_custom_call.1} parent=1 // pred_check_branch
      %27 = sbr.rel (0) target = $region25
    $region24: #{tpu_custom_call.1} parent=1 // pred_region
      _
    $region25: #{tpu_custom_call.1} parent=1 // pred_fallthru
      _
    // Predicated region
    $region26: #{tpu_custom_call.1} parent=1 // pred_check
      _
    $region27: #{tpu_custom_call.1} parent=1 // pred_check_branch
      %29 = sbr.rel (0) target = $region29
    $region28: #{tpu_custom_call.1} parent=1 // pred_region
      _
    $region29: #{tpu_custom_call.1} parent=1 // pred_fallthru
      _
    // Predicated region
    $region30: #{tpu_custom_call.1} parent=1 // pred_check
      _
    $region31: #{tpu_custom_call.1} parent=1 // pred_check_branch
      %31 = sbr.rel (0) target = $region33
    $region32: #{tpu_custom_call.1} parent=1 // pred_region
      _
    $region33: #{tpu_custom_call.1} parent=1 // pred_fallthru
      _
    %p32 = scmp.eq.s32.totalorder 0, 0
    // Predicated region
    $region34: #{tpu_custom_call.1} parent=1 // pred_check
      %p33 = pneg %p32
    $region35: #{tpu_custom_call.1} parent=1 // pred_check_branch
      %35 = sbr.rel (%p33) target = $region37
    $region36: #{tpu_custom_call.1} parent=1 // pred_region
      %vm36 = vcmask 261120
      %37 = vst.msk [vmem:[#allocation2] sm:$0xff] %vm36, 0.0
      %38 = vst.msk [vmem:[#allocation2 + $0x8] sm:$0xff] %vm36, 0.0
      %39 = vst.msk [vmem:[#allocation2 + $0x10] sm:$0xff] %vm36, 0.0
      %40 = vst.msk [vmem:[#allocation2 + $0x18] sm:$0xff] %vm36, 0.0
      %41 = vst.msk [vmem:[#allocation3] sm:$0xff] %vm36, 0.0
      %42 = vst.msk [vmem:[#allocation3 + $0x8] sm:$0xff] %vm36, 0.0
      %43 = vst.msk [vmem:[#allocation3 + $0x10] sm:$0xff] %vm36, 0.0
      %44 = vst.msk [vmem:[#allocation3 + $0x18] sm:$0xff] %vm36, 0.0
      %vm45 = vcmask 0
      %46 = vst.msk [vmem:[#allocation4] sm:$0x1] %vm45, 0.0
    $region37: #{tpu_custom_call.1} parent=1 // pred_fallthru
      _
    %v47 = vld [vmem:[%s4] sm:$0x1f]
    %v48 = vld [vmem:[%s0] sm:$0xff]
    %v49 = vld [vmem:[%s1] sm:$0xff]
    %v50 = vld [vmem:[%s2] sm:$0xff]
    %v51 = vld [vmem:[%s2 + $0x8] sm:$0xff]
    %v52 = vld [vmem:[%s2 + $0x10] sm:$0xff]
    %v53 = vld [vmem:[%s2 + $0x18] sm:$0xff]
    %v54 = vperm.slane %v47, 0
    %vm55 = vcmask 261120
    %v57 = vsel %vm55, %v48, 0
    %59 = vmatpush.msra.mxu0 0.0
    %60 = vmatpush.msra.mxu0 0.0
    %61 = vmatpush.msra.mxu0 0.0
    %62 = vmatpush.msra.mxu0 0.0
    %63 = vmatpush.msra.mxu0 0.0
    %64 = vmatpush.msra.mxu0 0.0
    %65 = vmatpush.msra.mxu0 0.0
    %66 = vmatpush.msra.mxu0 0.0
    %67 = vmatpush.msra.mxu0 0.0
    %68 = vmatpush.msra.mxu0 0.0
    %69 = vmatpush.msra.mxu0 0.0
    %70 = vmatpush.msra.mxu0 0.0
    %71 = vmatpush.msra.mxu0 %v53
    %72 = vmatpush.msra.mxu0 %v52
    %73 = vmatpush.msra.mxu0 %v51
    %74 = vmatpush.msra.mxu0 %v50
    %75 = vmatmul.f32.gmra.mxu0 %v57
    %v76 = vpop.f32.mrf.mxu0
    %v77 = vadd.f32 %v54, %v76
    %78 = vdwg.mxu0
    %v79 = vld [vmem:[%s3] sm:$0xff]
    %v80 = vld [vmem:[%s3 + $0x8] sm:$0xff]
    %v81 = vperm.slane %v47, 1
    %vm82 = vcmask 130048
    %v84 = vsel %vm82, %v49, 0
    %86 = vmatpush.msra.mxu0 0.0
    %87 = vmatpush.msra.mxu0 0.0
    %88 = vmatpush.msra.mxu0 0.0
    %89 = vmatpush.msra.mxu0 0.0
    %90 = vmatpush.msra.mxu0 0.0
    %91 = vmatpush.msra.mxu0 0.0
    %92 = vmatpush.msra.mxu0 0.0
    %93 = vmatpush.msra.mxu0 0.0
    %94 = vmatpush.msra.mxu0 0.0
    %95 = vmatpush.msra.mxu0 0.0
    %96 = vmatpush.msra.mxu0 0.0
    %97 = vmatpush.msra.mxu0 0.0
    %98 = vmatpush.msra.mxu0 0.0
    %99 = vmatpush.msra.mxu0 0.0
    %100 = vmatpush.msra.mxu0 %v80
    %101 = vmatpush.msra.mxu0 %v79
    %102 = vmatmul.f32.gmra.mxu0 %v84
    %v103 = vpop.f32.mrf.mxu0
    %v104 = vadd.f32 %v81, %v103
    %105 = vdwg.mxu0
    %v106 = vsel %vm55, %v77, 0.0
    %107 = vadd.xlane.f32.xlu0 %v106
    %v108 = vpop.xlane.xlu0 %107
    %v109 = vrcp.pop 32.0
    %v110 = vmul.f32 32.0, %v109
    %v111 = vsub.f32 1.0, %v110
    %v112 = vmul.f32 %v109, %v111
    %v113 = vadd.f32 %v109, %v112
    %vm114 = vweird.f32 %v109
    %v115 = vsel %vm114, %v109, %v113
    %v116 = vmul.f32 %v108, %v115
    %v117 = vsub.f32 %v77, %v116
    %v118 = vmul.f32 %v117, %v117
    %v119 = vsel %vm55, %v118, 0.0
    %120 = vadd.xlane.f32.xlu0 %v119
    %v121 = vpop.xlane.xlu0 %120
    %v122 = vmul.f32 %v121, %v115
    %v123 = vadd.f32 %v122, 1e-05
    %v124 = vrsqrt.pop %v123
    %v125 = vmul.f32 %v124, %v123
    %v126 = vmul.f32 %v125, %v124
    %v127 = vmul.f32 0.5, %v126
    %v128 = vsub.f32 1.5, %v127
    %v129 = vmul.f32 %v124, %v128
    %vm130 = vweird.f32 %v123
    %vm131 = vweird.f32 %v124
    %vm132 = vmor %vm130, %vm131
    %v133 = vsel %vm132, %v124, %v129
    %v134 = vmul.f32 %v117, %v133
    %v135 = vperm.slane %v47, 2
    %v136 = vmul.f32 %v134, %v135
    %v137 = vperm.slane %v47, 3
    %v138 = vadd.f32 %v136, %v137
    %v139 = vsel %vm55, %v104, 0.0
    %140 = vadd.xlane.f32.xlu0 %v139
    %v141 = vpop.xlane.xlu0 %140
    %v142 = vmul.f32 %v141, %v115
    %v143 = vsub.f32 %v104, %v142
    %v144 = vmul.f32 %v143, %v143
    %v145 = vsel %vm55, %v144, 0.0
    %146 = vadd.xlane.f32.xlu0 %v145
    %v147 = vpop.xlane.xlu0 %146
    %v148 = vmul.f32 %v147, %v115
    %v149 = vadd.f32 %v148, 1e-05
    %v150 = vrsqrt.pop %v149
    %v151 = vmul.f32 %v150, %v149
    %v152 = vmul.f32 %v151, %v150
    %v153 = vmul.f32 0.5, %v152
    %v154 = vsub.f32 1.5, %v153
    %v155 = vmul.f32 %v150, %v154
    %vm156 = vweird.f32 %v149
    %vm157 = vweird.f32 %v150
    %vm158 = vmor %vm156, %vm157
    %v159 = vsel %vm158, %v150, %v155
    %v160 = vmul.f32 %v143, %v159
    %v161 = vmul.f32 %v160, %v135
    %v162 = vadd.f32 %v161, %v137
    %v163 = vld [vmem:[#allocation4] sm:$0x1]
    %v164 = vmul.f32 %v138, %v162
    %v165 = vsel %vm55, %v164, 0.0
    %166 = vadd.xlane.f32.xlu0 %v165
    %v167 = vpop.xlane.xlu0 %166
    %v168 = vrot.slane %v167, 4
    %v169 = vadd.f32 %v167, %v168
    %v170 = vrot.slane %v169, 2
    %v171 = vadd.f32 %v169, %v170
    %v172 = vrot.slane %v171, 1
    %v173 = vadd.f32 %v171, %v172
    %s174 = vtos %v173
    %v175 = vstv %s174
    %v176 = vsub.f32 0.0, %v175
    %v177 = vmul.f32 %v138, %v138
    %v178 = vsel %vm55, %v177, 0.0
    %179 = vadd.xlane.f32.xlu0 %v178
    %v180 = vpop.xlane.xlu0 %179
    %v181 = vrot.slane %v180, 4
    %v182 = vadd.f32 %v180, %v181
    %v183 = vrot.slane %v182, 2
    %v184 = vadd.f32 %v182, %v183
    %v185 = vrot.slane %v184, 1
    %v186 = vadd.f32 %v184, %v185
    %s187 = vtos %v186
    %v188 = vstv %s187
    %v189 = vmul.f32 %v162, %v162
    %v190 = vsel %vm55, %v189, 0.0
    %191 = vadd.xlane.f32.xlu0 %v190
    %v192 = vpop.xlane.xlu0 %191
    %v193 = vrot.slane %v192, 4
    %v194 = vadd.f32 %v192, %v193
    %v195 = vrot.slane %v194, 2
    %v196 = vadd.f32 %v194, %v195
    %v197 = vrot.slane %v196, 1
    %v198 = vadd.f32 %v196, %v197
    %s199 = vtos %v198
    %v200 = vstv %s199
    %v201 = vadd.f32 %v188, %v200
    %v202 = vmul.f32 %v201, 0.2
    %v203 = vsub.f32 %v176, %v202
    %v204 = vadd.f32 %v163, %v203
    %vm205 = vcmask 0
    %206 = vst.msk [vmem:[#allocation4] sm:$0x1] %vm205, %v204
    %v207 = vld [vmem:[#allocation2] sm:$0xff]
    %v208 = vld [vmem:[#allocation2 + $0x8] sm:$0xff]
    %v209 = vld [vmem:[#allocation2 + $0x10] sm:$0xff]
    %v210 = vld [vmem:[#allocation2 + $0x18] sm:$0xff]
    %211 = vxpose.xlu0.b32.start [1/16] %v138, 128
    %212 = vxpose.xlu0.b32.cont [2/16] 0.0, 128
    %213 = vxpose.xlu0.b32.cont [3/16] 0.0, 128
    %214 = vxpose.xlu0.b32.cont [4/16] 0.0, 128
    %215 = vxpose.xlu0.b32.cont [5/16] 0.0, 128
    %216 = vxpose.xlu0.b32.cont [6/16] 0.0, 128
    %217 = vxpose.xlu0.b32.cont [7/16] 0.0, 128
    %218 = vxpose.xlu0.b32.cont [8/16] 0.0, 128
    %219 = vxpose.xlu0.b32.cont [9/16] 0.0, 128
    %220 = vxpose.xlu0.b32.cont [10/16] 0.0, 128
    %221 = vxpose.xlu0.b32.cont [11/16] 0.0, 128
    %222 = vxpose.xlu0.b32.cont [12/16] 0.0, 128
    %223 = vxpose.xlu0.b32.cont [13/16] 0.0, 128
    %224 = vxpose.xlu0.b32.cont [14/16] 0.0, 128
    %225 = vxpose.xlu0.b32.cont [15/16] 0.0, 128
    %226 = vxpose.xlu0.b32.end [16/16] 0.0, 128
    %v227 = vpop.trf.xlu0
    %v228 = vpop.trf.xlu0
    %v229 = vpop.trf.xlu0
    %v230 = vpop.trf.xlu0
    %v231 = vpop.trf.xlu0
    %v232 = vpop.trf.xlu0
    %v233 = vpop.trf.xlu0
    %v234 = vpop.trf.xlu0
    %v235 = vpop.trf.xlu0
    %v236 = vpop.trf.xlu0
    %v237 = vpop.trf.xlu0
    %v238 = vpop.trf.xlu0
    %v239 = vpop.trf.xlu0
    %v240 = vpop.trf.xlu0
    %v241 = vpop.trf.xlu0
    %v242 = vpop.trf.xlu0
    %vm243 = vcmask 64512
    %v245 = vsel %vm243, %v227, 0
    %v248 = vsel %vm243, %v228, 0
    %v251 = vsel %vm243, %v229, 0
    %v254 = vsel %vm243, %v230, 0
    %256 = vmatpush.msra.mxu0 0.0
    %257 = vmatpush.msra.mxu0 0.0
    %258 = vmatpush.msra.mxu0 0.0
    %259 = vmatpush.msra.mxu0 0.0
    %260 = vmatpush.msra.mxu0 0.0
    %261 = vmatpush.msra.mxu0 0.0
    %262 = vmatpush.msra.mxu0 0.0
    %263 = vmatpush.msra.mxu0 0.0
    %264 = vmatpush.msra.mxu0 0.0
    %265 = vmatpush.msra.mxu0 0.0
    %266 = vmatpush.msra.mxu0 0.0
    %267 = vmatpush.msra.mxu0 0.0
    %268 = vmatpush.msra.mxu0 0.0
    %269 = vmatpush.msra.mxu0 0.0
    %270 = vmatpush.msra.mxu0 0.0
    %271 = vmatpush.msra.mxu0 %v138
    %272 = vmatmul.f32.gmra.mxu0 %v245
    %v273 = vpop.f32.mrf.mxu0
    %v274 = vadd.f32 0.0, %v273
    %275 = vmatmul.f32.gmra.mxu0 %v248
    %v276 = vpop.f32.mrf.mxu0
    %v277 = vadd.f32 0.0, %v276
    %278 = vmatmul.f32.gmra.mxu0 %v251
    %v279 = vpop.f32.mrf.mxu0
    %v280 = vadd.f32 0.0, %v279
    %281 = vmatmul.f32.gmra.mxu0 %v254
    %v282 = vpop.f32.mrf.mxu0
    %v283 = vadd.f32 0.0, %v282
    %284 = vdwg.mxu0
    %v285 = vadd.f32 %v207, %v274
    %v286 = vadd.f32 %v208, %v277
    %v287 = vadd.f32 %v209, %v280
    %v288 = vadd.f32 %v210, %v283
    %289 = vst.msk [vmem:[#allocation2] sm:$0xff] %vm55, %v285
    %290 = vst.msk [vmem:[#allocation2 + $0x8] sm:$0xff] %vm55, %v286
    %291 = vst.msk [vmem:[#allocation2 + $0x10] sm:$0xff] %vm55, %v287
    %292 = vst.msk [vmem:[#allocation2 + $0x18] sm:$0xff] %vm55, %v288
    %v293 = vld [vmem:[#allocation3] sm:$0xff]
    %v294 = vld [vmem:[#allocation3 + $0x8] sm:$0xff]
    %v295 = vld [vmem:[#allocation3 + $0x10] sm:$0xff]
    %v296 = vld [vmem:[#allocation3 + $0x18] sm:$0xff]
    %297 = vxpose.xlu0.b32.start [1/16] %v162, 128
    %298 = vxpose.xlu0.b32.cont [2/16] 0.0, 128
    %299 = vxpose.xlu0.b32.cont [3/16] 0.0, 128
    %300 = vxpose.xlu0.b32.cont [4/16] 0.0, 128
    %301 = vxpose.xlu0.b32.cont [5/16] 0.0, 128
    %302 = vxpose.xlu0.b32.cont [6/16] 0.0, 128
    %303 = vxpose.xlu0.b32.cont [7/16] 0.0, 128
    %304 = vxpose.xlu0.b32.cont [8/16] 0.0, 128
    %305 = vxpose.xlu0.b32.cont [9/16] 0.0, 128
    %306 = vxpose.xlu0.b32.cont [10/16] 0.0, 128
    %307 = vxpose.xlu0.b32.cont [11/16] 0.0, 128
    %308 = vxpose.xlu0.b32.cont [12/16] 0.0, 128
    %309 = vxpose.xlu0.b32.cont [13/16] 0.0, 128
    %310 = vxpose.xlu0.b32.cont [14/16] 0.0, 128
    %311 = vxpose.xlu0.b32.cont [15/16] 0.0, 128
    %312 = vxpose.xlu0.b32.end [16/16] 0.0, 128
    %v313 = vpop.trf.xlu0
    %v314 = vpop.trf.xlu0
    %v315 = vpop.trf.xlu0
    %v316 = vpop.trf.xlu0
    %v317 = vpop.trf.xlu0
    %v318 = vpop.trf.xlu0
    %v319 = vpop.trf.xlu0
    %v320 = vpop.trf.xlu0
    %v321 = vpop.trf.xlu0
    %v322 = vpop.trf.xlu0
    %v323 = vpop.trf.xlu0
    %v324 = vpop.trf.xlu0
    %v325 = vpop.trf.xlu0
    %v326 = vpop.trf.xlu0
    %v327 = vpop.trf.xlu0
    %v328 = vpop.trf.xlu0
    %v330 = vsel %vm243, %v313, 0
    %v333 = vsel %vm243, %v314, 0
    %v336 = vsel %vm243, %v315, 0
    %v339 = vsel %vm243, %v316, 0
    %341 = vmatpush.msra.mxu0 0.0
    %342 = vmatpush.msra.mxu0 0.0
    %343 = vmatpush.msra.mxu0 0.0
    %344 = vmatpush.msra.mxu0 0.0
    %345 = vmatpush.msra.mxu0 0.0
    %346 = vmatpush.msra.mxu0 0.0
    %347 = vmatpush.msra.mxu0 0.0
    %348 = vmatpush.msra.mxu0 0.0
    %349 = vmatpush.msra.mxu0 0.0
    %350 = vmatpush.msra.mxu0 0.0
    %351 = vmatpush.msra.mxu0 0.0
    %352 = vmatpush.msra.mxu0 0.0
    %353 = vmatpush.msra.mxu0 0.0
    %354 = vmatpush.msra.mxu0 0.0
    %355 = vmatpush.msra.mxu0 0.0
    %356 = vmatpush.msra.mxu0 %v162
    %357 = vmatmul.f32.gmra.mxu0 %v330
    %v358 = vpop.f32.mrf.mxu0
    %v359 = vadd.f32 0.0, %v358
    %360 = vmatmul.f32.gmra.mxu0 %v333
    %v361 = vpop.f32.mrf.mxu0
    %v362 = vadd.f32 0.0, %v361
    %363 = vmatmul.f32.gmra.mxu0 %v336
    %v364 = vpop.f32.mrf.mxu0
    %v365 = vadd.f32 0.0, %v364
    %366 = vmatmul.f32.gmra.mxu0 %v339
    %v367 = vpop.f32.mrf.mxu0
    %v368 = vadd.f32 0.0, %v367
    %369 = vdwg.mxu0
    %v370 = vadd.f32 %v293, %v359
    %v371 = vadd.f32 %v294, %v362
    %v372 = vadd.f32 %v295, %v365
    %v373 = vadd.f32 %v296, %v368
    %374 = vst.msk [vmem:[#allocation3] sm:$0xff] %vm55, %v370
    %375 = vst.msk [vmem:[#allocation3 + $0x8] sm:$0xff] %vm55, %v371
    %376 = vst.msk [vmem:[#allocation3 + $0x10] sm:$0xff] %vm55, %v372
    %377 = vst.msk [vmem:[#allocation3 + $0x18] sm:$0xff] %vm55, %v373
    %v378 = vld [vmem:[%s5] sm:$0xff]
    %v379 = vld [vmem:[%s5 + $0x8] sm:$0xff]
    %v380 = vld [vmem:[%s5 + $0x10] sm:$0xff]
    %v381 = vld [vmem:[%s5 + $0x18] sm:$0xff]
    %v382 = vld [vmem:[%s5 + $0x20] sm:$0xff]
    %v383 = vld [vmem:[%s5 + $0x28] sm:$0xff]
    %v384 = vld [vmem:[%s5 + $0x30] sm:$0xff]
    %v385 = vld [vmem:[%s5 + $0x38] sm:$0xff]
    %v387 = vsel %vm55, %v162, 0
    %389 = vmatpush.msra.mxu0 0.0
    %390 = vmatpush.msra.mxu0 0.0
    %391 = vmatpush.msra.mxu0 0.0
    %392 = vmatpush.msra.mxu0 0.0
    %393 = vmatpush.msra.mxu0 0.0
    %394 = vmatpush.msra.mxu0 0.0
    %395 = vmatpush.msra.mxu0 0.0
    %396 = vmatpush.msra.mxu0 0.0
    %397 = vmatpush.msra.mxu0 0.0
    %398 = vmatpush.msra.mxu0 0.0
    %399 = vmatpush.msra.mxu0 0.0
    %400 = vmatpush.msra.mxu0 0.0
    %401 = vmatpush.msra.mxu0 %v385
    %402 = vmatpush.msra.mxu0 %v384
    %403 = vmatpush.msra.mxu0 %v383
    %404 = vmatpush.msra.mxu0 %v382
    %405 = vmatmul.f32.gmra.mxu0 %v387
    %v406 = vpop.f32.mrf.mxu0
    %v407 = vadd.f32 0.0, %v406
    %408 = vdwg.mxu0
    %v410 = vsel %vm55, %v138, 0
    %412 = vmatpush.msra.mxu0 0.0
    %413 = vmatpush.msra.mxu0 0.0
    %414 = vmatpush.msra.mxu0 0.0
    %415 = vmatpush.msra.mxu0 0.0
    %416 = vmatpush.msra.mxu0 0.0
    %417 = vmatpush.msra.mxu0 0.0
    %418 = vmatpush.msra.mxu0 0.0
    %419 = vmatpush.msra.mxu0 0.0
    %420 = vmatpush.msra.mxu0 0.0
    %421 = vmatpush.msra.mxu0 0.0
    %422 = vmatpush.msra.mxu0 0.0
    %423 = vmatpush.msra.mxu0 0.0
    %424 = vmatpush.msra.mxu0 %v381
    %425 = vmatpush.msra.mxu0 %v380
    %426 = vmatpush.msra.mxu0 %v379
    %427 = vmatpush.msra.mxu0 %v378
    %428 = vmatmul.f32.gmra.mxu0 %v410
    %v429 = vpop.f32.mrf.mxu0
    %v430 = vadd.f32 %v407, %v429
    %431 = vdwg.mxu0
    %v432 = vperm.slane %v47, 4
    %v433 = vadd.f32 %v430, %v432
    %v434 = vmax.f32 %v433, 0.0
    %v435 = vld [vmem:[%s6] sm:$0xff]
    %v436 = vld [vmem:[%s6 + $0x8] sm:$0xff]
    %v437 = vld [vmem:[%s6 + $0x10] sm:$0xff]
    %v438 = vld [vmem:[%s6 + $0x18] sm:$0xff]
    %v439 = vld [vmem:[%s7] sm:$0x1]
    %v441 = vperm.slane %v439, 0
    %v444 = vsel %vm55, %v434, 0
    %446 = vmatpush.msra.mxu0 0.0
    %447 = vmatpush.msra.mxu0 0.0
    %448 = vmatpush.msra.mxu0 0.0
    %449 = vmatpush.msra.mxu0 0.0
    %450 = vmatpush.msra.mxu0 0.0
    %451 = vmatpush.msra.mxu0 0.0
    %452 = vmatpush.msra.mxu0 0.0
    %453 = vmatpush.msra.mxu0 0.0
    %454 = vmatpush.msra.mxu0 0.0
    %455 = vmatpush.msra.mxu0 0.0
    %456 = vmatpush.msra.mxu0 0.0
    %457 = vmatpush.msra.mxu0 0.0
    %458 = vmatpush.msra.mxu0 %v438
    %459 = vmatpush.msra.mxu0 %v437
    %460 = vmatpush.msra.mxu0 %v436
    %461 = vmatpush.msra.mxu0 %v435
    %462 = vmatmul.f32.gmra.mxu0 %v444
    %v463 = vpop.f32.mrf.mxu0
    %v464 = vadd.f32 %v441, %v463
    %465 = vdwg.mxu0
    %v466 = vmax.f32 %v464, 0.0
    %vm467 = vcmask 15360
    %468 = vst.msk [vmem:[%s8] sm:$0xff] %vm467, %v466
    // Predicated region
    $region38: #{tpu_custom_call.1} parent=1 // pred_check
      %p469 = pneg %p32
    $region39: #{tpu_custom_call.1} parent=1 // pred_check_branch
      %471 = sbr.rel (%p469) target = $region41
    $region40: #{tpu_custom_call.1} parent=1 // pred_region
      %v472 = vld [vmem:[#allocation2] sm:$0xff]
      %v473 = vld [vmem:[#allocation2 + $0x8] sm:$0xff]
      %v474 = vld [vmem:[#allocation2 + $0x10] sm:$0xff]
      %v475 = vld [vmem:[#allocation2 + $0x18] sm:$0xff]
      %v476 = vld [vmem:[#allocation3] sm:$0xff]
      %v477 = vld [vmem:[#allocation3 + $0x8] sm:$0xff]
      %v478 = vld [vmem:[#allocation3 + $0x10] sm:$0xff]
      %v479 = vld [vmem:[#allocation3 + $0x18] sm:$0xff]
      %v480 = vmul.f32 %v472, %v472
      %v481 = vmul.f32 %v473, %v473
      %v482 = vmul.f32 %v474, %v474
      %v483 = vmul.f32 %v475, %v475
      %v484 = vsel %vm55, %v480, 0.0
      %v485 = vsel %vm55, %v481, 0.0
      %v486 = vadd.f32 %v484, %v485
      %v487 = vsel %vm55, %v482, 0.0
      %v488 = vadd.f32 %v486, %v487
      %v489 = vsel %vm55, %v483, 0.0
      %v490 = vadd.f32 %v488, %v489
      %491 = vadd.xlane.f32.xlu0 %v490
      %v492 = vpop.xlane.xlu0 %491
      %v493 = vrot.slane %v492, 4
      %v494 = vadd.f32 %v492, %v493
      %v495 = vrot.slane %v494, 2
      %v496 = vadd.f32 %v494, %v495
      %v497 = vrot.slane %v496, 1
      %v498 = vadd.f32 %v496, %v497
      %s499 = vtos %v498
      %v500 = vmul.f32 %v476, %v476
      %v501 = vmul.f32 %v477, %v477
      %v502 = vmul.f32 %v478, %v478
      %v503 = vmul.f32 %v479, %v479
      %v504 = vsel %vm55, %v500, 0.0
      %v505 = vsel %vm55, %v501, 0.0
      %v506 = vadd.f32 %v504, %v505
      %v507 = vsel %vm55, %v502, 0.0
      %v508 = vadd.f32 %v506, %v507
      %v509 = vsel %vm55, %v503, 0.0
      %v510 = vadd.f32 %v508, %v509
      %511 = vadd.xlane.f32.xlu0 %v510
      %v512 = vpop.xlane.xlu0 %511
      %v513 = vrot.slane %v512, 4
      %v514 = vadd.f32 %v512, %v513
      %v515 = vrot.slane %v514, 2
      %v516 = vadd.f32 %v514, %v515
      %v517 = vrot.slane %v516, 1
      %v518 = vadd.f32 %v516, %v517
      %s519 = vtos %v518
      %s520 = sadd.f32 %s499, %s519
      %v521 = vld [vmem:[#allocation4] sm:$0x1]
      %s522 = sadd.f32 %s520, 64.0
      %s523 = smul.f32 %s522, 0.1
      %v524 = vstv %s523
      %v525 = vadd.f32 %v521, %v524
      %526 = vst.msk [vmem:[#allocation5] sm:$0x1] %vm205, %v525
    $region41: #{tpu_custom_call.1} parent=1 // pred_fallthru
      _
    // Predicated region
    $region42: #{tpu_custom_call.1} parent=1 // pred_check
      _
    $region43: #{tpu_custom_call.1} parent=1 // pred_check_branch
      %528 = sbr.rel (0) target = $region45
    $region44: #{tpu_custom_call.1} parent=1 // pred_region
      _
    $region45: #{tpu_custom_call.1} parent=1 // pred_fallthru
      _
    // Predicated region
    $region46: #{tpu_custom_call.1} parent=1 // pred_check
      _
    $region47: #{tpu_custom_call.1} parent=1 // pred_check_branch
      %530 = sbr.rel (0) target = $region49
    $region48: #{tpu_custom_call.1} parent=1 // pred_region
      %532 = vsyncadd [#allocation6], 0
      %s534 = sshll.u32 [#allocation5], 4
      %s535 = int_to_ptr.vmem [resolvable:$true] %s534
      %s536 = sshll.u32 %s9, 4
      %s537 = int_to_ptr.hbm [resolvable:$true] %s536
      %539 = dma.vmem_to_hbm [thread:$0]  %s535, 16, %s537, [#allocation6]
    $region49: #{tpu_custom_call.1} parent=1 // pred_fallthru
      _
    // Predicated region
    $region50: #{tpu_custom_call.1} parent=1 // pred_check
      _
    $region51: #{tpu_custom_call.1} parent=1 // pred_check_branch
      %541 = sbr.rel (0) target = $region53
    $region52: #{tpu_custom_call.1} parent=1 // pred_region
      _
    $region53: #{tpu_custom_call.1} parent=1 // pred_fallthru
      _
    // Predicated region
    $region54: #{tpu_custom_call.1} parent=1 // pred_check
      _
    $region55: #{tpu_custom_call.1} parent=1 // pred_check_branch
      %543 = sbr.rel (0) target = $region57
    $region56: #{tpu_custom_call.1} parent=1 // pred_region
      %545 = dma.done [#allocation6], 16
    $region57: #{tpu_custom_call.1} parent=1 // pred_fallthru
      _
    %546 = vsyncpa [#allocation6], 1

</llo_original>
